<compile_context>
chip_gen: v6e
topology: v6e:2x2x1
jax: 0.10.0
libtpu: 0.0.40
codegen_flags: <defaults>
</compile_context>

<pallas_src>
import functools
import math

import numpy as np
import jax
import jax.numpy as jnp
from jax.experimental import pallas as pl
from jax.experimental.pallas import tpu as pltpu

# bf16 operands for the three MXU matmuls (v6e/v7x fast path); set to jnp.float32
# for an exact-f32 path.  Accumulation and all element-wise math stay f32.
MXU_DTYPE = jnp.bfloat16


# -----------------------------------------------------------------------------
# Fused kernel: wide conv matmul + roll/mask pool + single-step LSTM + fc2 + sigmoid.
# Ref layout (blocks, per grid step over the batch axis):
#   emb_ref   : (TB*S, E)            bf16   flattened embedded tokens tile
#   wconv_ref : (E, K*nF)            bf16   all conv taps, K = max(fs), nF = n_convs*F
#                                           column (k*nF + ci*F + f) = tap k of conv ci
#                                           (zero columns for k >= fs_ci)
#   cbias_ref : (1, nF)              f32    conv biases in `cat` lane order
#   mask_ref  : (S, nF)              f32    1.0 where conv position is valid else 0.0
#   wih_ref   : (nF, 3H)             bf16   W_ih^T, gate order [i | o | g]
#   blstm_ref : (1, 3H)              f32    b_ih + b_hh (same gate order)
#   w2_ref    : (H, out_dim)         bf16   fc2 weight^T
#   b2_ref    : (1, out_dim)         f32
#   out_ref   : (TB, out_dim)        f32
# -----------------------------------------------------------------------------
def make_cnn_lstm_kernel(filter_sizes, n_filters, hidden, batch_tile, seq_len):
    n_convs = len(filter_sizes)
    nF = n_convs * n_filters
    K = max(filter_sizes)
    H = hidden
    S = seq_len
    TB = batch_tile
    N = TB * S  # rows of the flattened (batch-tile, time) axis

    def kernel(emb_ref, wconv_ref, cbias_ref, mask_ref,
               wih_ref, blstm_ref, w2_ref, b2_ref, out_ref):
        # ---- conv stack: ONE wide MXU matmul covering every tap of every conv ----
        x2 = emb_ref[...]                                       # (N, E) bf16
        y = jnp.dot(x2, wconv_ref[...],
                    preferred_element_type=jnp.float32)         # (N, K*nF) f32

        # Shift-accumulate the taps with XLU sublane rotates (np.roll semantics:
        # rolled row r picks up y row r+k).  Rows that wrap across a batch-sample
        # boundary only ever land in time positions s >= S - k, which are always
        # zeroed by the pool-validity mask below, so the wrap is harmless.
        acc = y[:, 0:nF]                                        # tap k = 0
        for k in range(1, K):
            tap = y[:, k * nF:(k + 1) * nF]                     # (N, nF)
            acc = acc + pltpu.roll(tap, shift=N - k, axis=0)    # row r <- row r+k

        conved = jnp.maximum(acc + cbias_ref[...], 0.0)         # bias + ReLU (f32)
        conved = conved.reshape(TB, S, nF) * mask_ref[...].reshape(1, S, nF)
        # ReLU >= 0 and masked slots are exactly 0, so a plain max over the full
        # time axis equals the max over the valid conv positions.
        cat = jnp.max(conved, axis=1)                           # (TB, nF) == torch cat

        # ---- single-step LSTM with zero init_hidden(): gates [i | o | g] only ----
        # (forget gate multiplies c0 == 0 and W_hh multiplies h0 == 0 -> both dead)
        gates = (jnp.dot(cat.astype(MXU_DTYPE), wih_ref[...],
                         preferred_element_type=jnp.float32)
                 + blstm_ref[...])                              # (TB, 3H) f32
        sig_io = jax.nn.sigmoid(gates[:, 0:2 * H])              # sigmoid only on i|o
        g_gate = jnp.tanh(gates[:, 2 * H:3 * H])                # tanh only on g
        c = sig_io[:, 0:H] * g_gate                             # i * g
        h = sig_io[:, H:2 * H] * jnp.tanh(c)                    # o * tanh(c)

        # ---- fc2 + sigmoid ----
        y2 = (jnp.dot(h.astype(MXU_DTYPE), w2_ref[...],
                      preferred_element_type=jnp.float32) + b2_ref[...])
        out_ref[...] = jax.nn.sigmoid(y2)                       # (TB, out_dim) f32

    return kernel


def _pick_batch_tile(batch):
    for tb in (8, 4, 2, 1):                  # keep batch tile sublane-aligned if possible
        if batch % tb == 0:
            return tb
    return 1


# -----------------------------------------------------------------------------
# Wrapper: embedding gather (XLA glue) + one fused pallas_call over a batch grid.
# -----------------------------------------------------------------------------
@functools.partial(jax.jit, static_argnames=("filter_sizes",))
def cnn_lstm_forward(tokens, params, *, filter_sizes):
    # tokens: (S, B) int32 -> x.permute(1, 0) -> (B, S)
    x = tokens.T
    # Embedding lookup stays in XLA (rows are only E*4 bytes at this size).
    # TODO(synk): for large E, move the gather into the kernel via
    # PrefetchScalarGridSpec + per-row async copies to avoid re-reading (B,S,E) from HBM.
    emb = jnp.take(params["embedding"], x, axis=0).astype(MXU_DTYPE)   # (B, S, E)
    B, S, E = emb.shape

    n_convs = len(filter_sizes)
    nF = params["conv_b"].shape[-1]
    n_filters = nF // n_convs
    K = max(filter_sizes)
    H = params["fc2_w_t"].shape[0]
    out_dim = params["fc2_w_t"].shape[1]
    assert K <= S, "filter size larger than sequence length"

    # 0/1 validity mask over (time, cat-lane): conv ci is valid for s <= S - fs_ci.
    mask = np.zeros((S, nF), np.float32)
    for ci, fs in enumerate(filter_sizes):
        mask[: S - fs + 1, ci * n_filters:(ci + 1) * n_filters] = 1.0
    mask = jnp.asarray(mask)

    TB = _pick_batch_tile(B)
    emb2 = emb.reshape(B * S, E)             # flatten once in XLA; tiles stay lane-dense

    kernel = make_cnn_lstm_kernel(tuple(filter_sizes), n_filters, H, TB, S)
    full = lambda b: (0, 0)                  # weights: constant block -> VMEM-resident

    return pl.pallas_call(
        kernel,
        grid=(B // TB,),
        in_specs=[
            pl.BlockSpec((TB * S, E), lambda b: (b, 0)),    # embedded tokens tile
            pl.BlockSpec((E, K * nF), full),                # packed conv taps
            pl.BlockSpec((1, nF), full),                    # packed conv bias
            pl.BlockSpec((S, nF), full),                    # pool-validity mask
            pl.BlockSpec((nF, 3 * H), full),                # W_ih^T  [i|o|g]
            pl.BlockSpec((1, 3 * H), full),                 # b_ih + b_hh
            pl.BlockSpec((H, out_dim), full),               # fc2 W^T
            pl.BlockSpec((1, out_dim), full),               # fc2 b
        ],
        out_specs=pl.BlockSpec((TB, out_dim), lambda b: (b, 0)),
        out_shape=jax.ShapeDtypeStruct((B, out_dim), jnp.float32),
        compiler_params=pltpu.CompilerParams(
            dimension_semantics=("parallel",),              # batch axis: megacore-shardable
            vmem_limit_bytes=32 * 1024 * 1024,              # safe on v5e/v6e and v7x (64 MiB)
        ),
    )(emb2, params["conv_w"], params["conv_b"], mask,
      params["lstm_wih_t"], params["lstm_b"],
      params["fc2_w_t"], params["fc2_b"])


# -----------------------------------------------------------------------------
# Deterministic, PyTorch-like parameter init, stored in kernel-ready packed layouts.
# -----------------------------------------------------------------------------
def init_params(key, vocab, emb_dim, n_filters, filter_sizes, out_dim, hidden):
    n_convs = len(filter_sizes)
    nF = n_convs * n_filters
    K = max(filter_sizes)
    keys = jax.random.split(key, 1 + 2 * n_convs + 5)
    kit = iter(keys)

    def u(k, shape, scale):
        return jax.random.uniform(k, shape, jnp.float32, -scale, scale)

    params = {"embedding": jax.random.normal(next(kit), (vocab, emb_dim), jnp.float32)}

    # Pack every tap of every conv into ONE (E, K*nF) matrix whose column order
    # (tap-major, then conv, then channel) makes the pooled result come out directly
    # in `cat` order; taps k >= fs_i are zero columns.
    wconv = np.zeros((emb_dim, K * nF), np.float32)
    cbias = np.zeros((1, nF), np.float32)
    for ci, fs in enumerate(filter_sizes):
        s = 1.0 / math.sqrt(1 * fs * emb_dim)       # torch Conv2d fan_in = in_ch*fs*E
        w = np.asarray(u(next(kit), (fs, emb_dim, n_filters), s))   # (fs, E, F)
        b = np.asarray(u(next(kit), (n_filters,), s))
        for k in range(fs):
            wconv[:, k * nF + ci * n_filters: k * nF + (ci + 1) * n_filters] = w[k]
        cbias[0, ci * n_filters:(ci + 1) * n_filters] = b
    params["conv_w"] = jnp.asarray(wconv).astype(MXU_DTYPE)
    params["conv_b"] = jnp.asarray(cbias)

    # Single-step LSTM with zero init_hidden(): only gates [i | o | g] are live.
    # TODO(synk): nn.LSTM's forget-gate, W_hh and recurrence only multiply the zero
    # init_hidden() state of this length-1 sequence, so they are not materialized;
    # the unused `self.fc` layer of the reference module is likewise omitted.
    s = 1.0 / math.sqrt(hidden)
    params["lstm_wih_t"] = u(next(kit), (nF, 3 * hidden), s).astype(MXU_DTYPE)
    b_ih = u(next(kit), (3 * hidden,), s)
    b_hh = u(next(kit), (3 * hidden,), s)
    params["lstm_b"] = (b_ih + b_hh).reshape(1, 3 * hidden)

    s2 = 1.0 / math.sqrt(hidden)
    params["fc2_w_t"] = u(next(kit), (hidden, out_dim), s2).astype(MXU_DTYPE)
    params["fc2_b"] = u(next(kit), (1, out_dim), s2)
    return params


if __name__ == "__main__":
    # Small shapes consistent with the module; batch chosen so the parallel batch
    # grid is exercised (TB=8 -> grid=(2,)).
    VOCAB, EMB_DIM = 50, 16
    N_FILTERS, FILTER_SIZES = 8, (2, 3, 4)
    OUT_DIM, HIDDEN = 4, 32
    SEQ, BATCH = 8, 16

    root = jax.random.PRNGKey(0)
    k_par, k_tok = jax.random.split(root)

    params = init_params(k_par, VOCAB, EMB_DIM, N_FILTERS, FILTER_SIZES, OUT_DIM, HIDDEN)
    tokens = jax.random.randint(k_tok, (SEQ, BATCH), 0, VOCAB, dtype=jnp.int32)

    out = cnn_lstm_forward(tokens, params, filter_sizes=FILTER_SIZES)
    out = jax.block_until_ready(out)

    assert out.shape == (BATCH, OUT_DIM)
    assert bool(jnp.all(jnp.isfinite(out)))
    assert bool(jnp.all((out >= 0.0) & (out <= 1.0)))
    print("KERNEL_OK")
</pallas_src>

<mosaic_0001>
module attributes {stable_mosaic.version = 11 : i64} {
  func.func @kernel(%arg0: i32, %arg1: memref<64x16xbf16, #tpu.memory_space<vmem>>, %arg2: memref<16x96xbf16, #tpu.memory_space<vmem>>, %arg3: memref<1x24xf32, #tpu.memory_space<vmem>>, %arg4: memref<8x24xf32, #tpu.memory_space<vmem>>, %arg5: memref<24x96xbf16, #tpu.memory_space<vmem>>, %arg6: memref<1x96xf32, #tpu.memory_space<vmem>>, %arg7: memref<32x4xbf16, #tpu.memory_space<vmem>>, %arg8: memref<1x4xf32, #tpu.memory_space<vmem>>, %arg9: memref<8x4xf32, #tpu.memory_space<vmem>>) attributes {dimension_semantics = [#tpu.dimension_semantics<parallel>], iteration_bounds = array<i64: 2>, scalar_prefetch = 0 : i64, scratch_operands = 0 : i64, tpu.core_type = #tpu.core_type<tc>, window_params = [{transform_indices = @transform_0, window_bounds = array<i64: 64, 16>}, {pipeline_mode = #tpu.pipeline_mode<synchronous>, transform_indices = @transform_1, window_bounds = array<i64: 16, 96>}, {pipeline_mode = #tpu.pipeline_mode<synchronous>, transform_indices = @transform_2, window_bounds = array<i64: 1, 24>}, {pipeline_mode = #tpu.pipeline_mode<synchronous>, transform_indices = @transform_3, window_bounds = array<i64: 8, 24>}, {pipeline_mode = #tpu.pipeline_mode<synchronous>, transform_indices = @transform_4, window_bounds = array<i64: 24, 96>}, {pipeline_mode = #tpu.pipeline_mode<synchronous>, transform_indices = @transform_5, window_bounds = array<i64: 1, 96>}, {pipeline_mode = #tpu.pipeline_mode<synchronous>, transform_indices = @transform_6, window_bounds = array<i64: 32, 4>}, {pipeline_mode = #tpu.pipeline_mode<synchronous>, transform_indices = @transform_7, window_bounds = array<i64: 1, 4>}, {transform_indices = @transform_8, window_bounds = array<i64: 8, 4>}]} {
    %c0 = arith.constant 0 : index
    %c0_0 = arith.constant 0 : index
    %0 = vector.load %arg1[%c0, %c0_0] : memref<64x16xbf16, #tpu.memory_space<vmem>>, vector<64x16xbf16>
    %c0_1 = arith.constant 0 : index
    %c0_2 = arith.constant 0 : index
    %1 = vector.load %arg2[%c0_1, %c0_2] : memref<16x96xbf16, #tpu.memory_space<vmem>>, vector<16x96xbf16>
    %cst = arith.constant dense<0.000000e+00> : vector<64x96xf32>
    %2 = tpu.matmul %0, %1, %cst {dimension_numbers = #tpu.dot_dimension_numbers<[1], [0], [0], [1], [0, 0, 1, 1], [], []>} : vector<64x16xbf16>, vector<16x96xbf16>, vector<64x96xf32> -> vector<64x96xf32>
    %3 = vector.extract_strided_slice %2 {offsets = [0, 0], sizes = [64, 24], strides = [1, 1]} : vector<64x96xf32> to vector<64x24xf32>
    %4 = vector.extract_strided_slice %2 {offsets = [0, 24], sizes = [64, 24], strides = [1, 1]} : vector<64x96xf32> to vector<64x24xf32>
    %c63_i32 = arith.constant 63 : i32
    %5 = tpu.dynamic_rotate %4 by %c63_i32 dim 0 : vector<64x24xf32>, i32 -> vector<64x24xf32>
    %6 = arith.addf %3, %5 : vector<64x24xf32>
    %7 = vector.extract_strided_slice %2 {offsets = [0, 48], sizes = [64, 24], strides = [1, 1]} : vector<64x96xf32> to vector<64x24xf32>
    %c62_i32 = arith.constant 62 : i32
    %8 = tpu.dynamic_rotate %7 by %c62_i32 dim 0 : vector<64x24xf32>, i32 -> vector<64x24xf32>
    %9 = arith.addf %6, %8 : vector<64x24xf32>
    %10 = vector.extract_strided_slice %2 {offsets = [0, 72], sizes = [64, 24], strides = [1, 1]} : vector<64x96xf32> to vector<64x24xf32>
    %c61_i32 = arith.constant 61 : i32
    %11 = tpu.dynamic_rotate %10 by %c61_i32 dim 0 : vector<64x24xf32>, i32 -> vector<64x24xf32>
    %12 = arith.addf %9, %11 : vector<64x24xf32>
    %c0_3 = arith.constant 0 : index
    %c0_4 = arith.constant 0 : index
    %13 = vector.load %arg3[%c0_3, %c0_4] : memref<1x24xf32, #tpu.memory_space<vmem>>, vector<1x24xf32>
    %14 = vector.broadcast %13 : vector<1x24xf32> to vector<64x24xf32>
    %15 = arith.addf %12, %14 : vector<64x24xf32>
    %cst_5 = arith.constant 0.000000e+00 : f32
    %16 = vector.broadcast %cst_5 : f32 to vector<64x24xf32>
    %17 = arith.maximumf %15, %16 : vector<64x24xf32>
    %18 = vector.shape_cast %17 : vector<64x24xf32> to vector<8x8x24xf32>
    %c0_6 = arith.constant 0 : index
    %c0_7 = arith.constant 0 : index
    %19 = vector.load %arg4[%c0_6, %c0_7] : memref<8x24xf32, #tpu.memory_space<vmem>>, vector<8x24xf32>
    %20 = vector.shape_cast %19 : vector<8x24xf32> to vector<1x8x24xf32>
    %21 = vector.broadcast %20 : vector<1x8x24xf32> to vector<8x8x24xf32>
    %22 = arith.mulf %18, %21 : vector<8x8x24xf32>
    %cst_8 = arith.constant dense<0xFF800000> : vector<8x24xf32>
    %23 = vector.multi_reduction <maximumf>, %22, %cst_8 [1] : vector<8x8x24xf32> to vector<8x24xf32>
    %24 = arith.truncf %23 : vector<8x24xf32> to vector<8x24xbf16>
    %c0_9 = arith.constant 0 : index
    %c0_10 = arith.constant 0 : index
    %25 = vector.load %arg5[%c0_9, %c0_10] : memref<24x96xbf16, #tpu.memory_space<vmem>>, vector<24x96xbf16>
    %cst_11 = arith.constant dense<0.000000e+00> : vector<8x96xf32>
    %26 = tpu.matmul %24, %25, %cst_11 {dimension_numbers = #tpu.dot_dimension_numbers<[1], [0], [0], [1], [0, 0, 1, 1], [], []>} : vector<8x24xbf16>, vector<24x96xbf16>, vector<8x96xf32> -> vector<8x96xf32>
    %c0_12 = arith.constant 0 : index
    %c0_13 = arith.constant 0 : index
    %27 = vector.load %arg6[%c0_12, %c0_13] : memref<1x96xf32, #tpu.memory_space<vmem>>, vector<1x96xf32>
    %28 = vector.broadcast %27 : vector<1x96xf32> to vector<8x96xf32>
    %29 = arith.addf %26, %28 : vector<8x96xf32>
    %30 = vector.extract_strided_slice %29 {offsets = [0, 0], sizes = [8, 64], strides = [1, 1]} : vector<8x96xf32> to vector<8x64xf32>
    %31 = arith.negf %30 : vector<8x64xf32>
    %32 = math.exp %31 : vector<8x64xf32>
    %cst_14 = arith.constant 1.000000e+00 : f32
    %33 = vector.broadcast %cst_14 : f32 to vector<8x64xf32>
    %34 = arith.addf %33, %32 : vector<8x64xf32>
    %35 = arith.divf %33, %34 : vector<8x64xf32>
    %36 = vector.extract_strided_slice %29 {offsets = [0, 64], sizes = [8, 32], strides = [1, 1]} : vector<8x96xf32> to vector<8x32xf32>
    %37 = math.tanh %36 : vector<8x32xf32>
    %38 = vector.extract_strided_slice %35 {offsets = [0, 0], sizes = [8, 32], strides = [1, 1]} : vector<8x64xf32> to vector<8x32xf32>
    %39 = arith.mulf %38, %37 : vector<8x32xf32>
    %40 = vector.extract_strided_slice %35 {offsets = [0, 32], sizes = [8, 32], strides = [1, 1]} : vector<8x64xf32> to vector<8x32xf32>
    %41 = math.tanh %39 : vector<8x32xf32>
    %42 = arith.mulf %40, %41 : vector<8x32xf32>
    %43 = arith.truncf %42 : vector<8x32xf32> to vector<8x32xbf16>
    %c0_15 = arith.constant 0 : index
    %c0_16 = arith.constant 0 : index
    %44 = vector.load %arg7[%c0_15, %c0_16] : memref<32x4xbf16, #tpu.memory_space<vmem>>, vector<32x4xbf16>
    %cst_17 = arith.constant dense<0.000000e+00> : vector<8x4xf32>
    %45 = tpu.matmul %43, %44, %cst_17 {dimension_numbers = #tpu.dot_dimension_numbers<[1], [0], [0], [1], [0, 0, 1, 1], [], []>} : vector<8x32xbf16>, vector<32x4xbf16>, vector<8x4xf32> -> vector<8x4xf32>
    %c0_18 = arith.constant 0 : index
    %c0_19 = arith.constant 0 : index
    %46 = vector.load %arg8[%c0_18, %c0_19] : memref<1x4xf32, #tpu.memory_space<vmem>>, vector<1x4xf32>
    %47 = vector.broadcast %46 : vector<1x4xf32> to vector<8x4xf32>
    %48 = arith.addf %45, %47 : vector<8x4xf32>
    %49 = arith.negf %48 : vector<8x4xf32>
    %50 = math.exp %49 : vector<8x4xf32>
    %cst_20 = arith.constant 1.000000e+00 : f32
    %51 = vector.broadcast %cst_20 : f32 to vector<8x4xf32>
    %52 = arith.addf %51, %50 : vector<8x4xf32>
    %53 = arith.divf %51, %52 : vector<8x4xf32>
    %c0_21 = arith.constant 0 : index
    %c0_22 = arith.constant 0 : index
    %54 = vector.load %arg9[%c0_21, %c0_22] : memref<8x4xf32, #tpu.memory_space<vmem>>, vector<8x4xf32>
    tpu.vector_store %arg9[%c0_21, %c0_22], %53 {strides = array<i32>} : memref<8x4xf32, #tpu.memory_space<vmem>>, vector<8x4xf32>,
    return
  }
  func.func @transform_0(%arg0: i32) -> (i32, i32) {
    %c0_i32 = arith.constant 0 : i32
    %c0_i32_0 = arith.constant 0 : i32
    return %arg0, %c0_i32 : i32, i32
  }
  func.func @transform_1(%arg0: i32) -> (i32, i32) {
    %c0_i32 = arith.constant 0 : i32
    %c0_i32_0 = arith.constant 0 : i32
    %c0_i32_1 = arith.constant 0 : i32
    return %c0_i32, %c0_i32_0 : i32, i32
  }
  func.func @transform_2(%arg0: i32) -> (i32, i32) {
    %c0_i32 = arith.constant 0 : i32
    %c0_i32_0 = arith.constant 0 : i32
    %c0_i32_1 = arith.constant 0 : i32
    return %c0_i32, %c0_i32_0 : i32, i32
  }
  func.func @transform_3(%arg0: i32) -> (i32, i32) {
    %c0_i32 = arith.constant 0 : i32
    %c0_i32_0 = arith.constant 0 : i32
    %c0_i32_1 = arith.constant 0 : i32
    return %c0_i32, %c0_i32_0 : i32, i32
  }
  func.func @transform_4(%arg0: i32) -> (i32, i32) {
    %c0_i32 = arith.constant 0 : i32
    %c0_i32_0 = arith.constant 0 : i32
    %c0_i32_1 = arith.constant 0 : i32
    return %c0_i32, %c0_i32_0 : i32, i32
  }
  func.func @transform_5(%arg0: i32) -> (i32, i32) {
    %c0_i32 = arith.constant 0 : i32
    %c0_i32_0 = arith.constant 0 : i32
    %c0_i32_1 = arith.constant 0 : i32
    return %c0_i32, %c0_i32_0 : i32, i32
  }
  func.func @transform_6(%arg0: i32) -> (i32, i32) {
    %c0_i32 = arith.constant 0 : i32
    %c0_i32_0 = arith.constant 0 : i32
    %c0_i32_1 = arith.constant 0 : i32
    return %c0_i32, %c0_i32_0 : i32, i32
  }
  func.func @transform_7(%arg0: i32) -> (i32, i32) {
    %c0_i32 = arith.constant 0 : i32
    %c0_i32_0 = arith.constant 0 : i32
    %c0_i32_1 = arith.constant 0 : i32
    return %c0_i32, %c0_i32_0 : i32, i32
  }
  func.func @transform_8(%arg0: i32) -> (i32, i32) {
    %c0_i32 = arith.constant 0 : i32
    %c0_i32_0 = arith.constant 0 : i32
    return %arg0, %c0_i32 : i32, i32
  }
}

</mosaic_0001>

<llo_original>
// kernel: cnn_lstm_forward.1
$region0: #{cnn_lstm_forward.1}
  #allocation0 [shape = 'u32[]', space=smem, size = 0x4, offset = 0x4, fixed_abs, tag = 'smem constant byte address 0x4 - core index']
  #allocation1 [shape = 'u32[144,128]{1,0:T(1,128)}', space=vmem, size = 0x12000, scoped, tag = 'internal scratch']
  %s0 = inlined_call_operand.vmem [shape: bf16[128,16], index: 0, kind: input, shape index: {}]
  %s1 = inlined_call_operand.vmem [shape: bf16[16,96], index: 1, kind: input, shape index: {}]
  %s2 = inlined_call_operand.vmem [shape: f32[1,24], index: 2, kind: input, shape index: {}]
  %s3 = inlined_call_operand.vmem [shape: f32[8,24], index: 3, kind: input, shape index: {}]
  %s4 = inlined_call_operand.vmem [shape: bf16[24,96], index: 4, kind: input, shape index: {}]
  %s5 = inlined_call_operand.vmem [shape: f32[1,96], index: 5, kind: input, shape index: {}]
  %s6 = inlined_call_operand.vmem [shape: bf16[32,4], index: 6, kind: input, shape index: {}]
  %s7 = inlined_call_operand.vmem [shape: f32[1,4], index: 7, kind: input, shape index: {}]
  %s8 = inlined_call_operand.vmem [shape: f32[16,4], index: 8, kind: output, shape index: {}]
  %s9 = sld [smem:[#allocation0]]
  $region65: #{cnn_lstm_forward.1} parent=0
    _
  %s11 = ssub.s32 1, %s9
  %s12 = scalar_select 0, %s11, %s9
  loop: start=0, step=1, limit=4
  $region2: #{cnn_lstm_forward.1} parent=0 // loop_pre_header
    _
  $region3: #{cnn_lstm_forward.1} parent=0 // loop_header
    %s14 = sphi 0, %s18
    %p15 = scmp.ge.s32.totalorder %s14, 4
    %s24 = sphi 0, %s26
    %s27 = sphi 0, %s24
    %s28 = sphi 0, %s27
    %s44 = sphi 0, %s28
    %s48 = sphi 0, %s48
    %s50 = sphi 0, %s48
    %s51 = sphi 0, %s50
    %s65 = sphi 0, %s51
    %s69 = sphi 0, %s69
    %s71 = sphi 0, %s69
    %s72 = sphi 0, %s71
    %s86 = sphi 0, %s72
    %s90 = sphi 0, %s90
    %s92 = sphi 0, %s90
    %s93 = sphi 0, %s92
    %s107 = sphi 0, %s93
    %s111 = sphi 0, %s111
    %s113 = sphi 0, %s111
    %s114 = sphi 0, %s113
    %s128 = sphi 0, %s114
    %s132 = sphi 0, %s132
    %s134 = sphi 0, %s132
    %s135 = sphi 0, %s134
    %s149 = sphi 0, %s135
    %s153 = sphi 0, %s153
    %s155 = sphi 0, %s153
    %s156 = sphi 0, %s155
    %s170 = sphi 0, %s156
    %s174 = sphi 0, %s174
    %s176 = sphi 0, %s174
    %s177 = sphi 0, %s176
    %s191 = sphi 0, %s177
    %s197 = sphi 0, %s199
    %s200 = sphi 0, %s197
    %s201 = sphi 0, %s200
    %s217 = sphi 0, %s201
  $region4: #{cnn_lstm_forward.1} parent=0 // loop_header_branch
    %17 = sbr.rel (%p15) target = $region8
  $region5: #{cnn_lstm_forward.1} parent=0 // loop_body
    %s19 = ssub.s32 %s14, 1
    %s20 = ssub.s32 %s14, 2
    %s21 = sadd.s32 %s14, 1
    %s22 = ssub.s32 %s14, %s21
    %p23 = scmp.eq.s32.totalorder %s22, 0
    %s25 = sadd.s32 %s24, 1
    %s26 = scalar_select %p23, %s24, %s25
    %p29 = pneg %p23
    %p30 = scmp.eq.s32.totalorder %s14, 1
    %p31 = por %p29, %p30
    %p32 = scmp.ne.s32.totalorder %s24, %s27
    %p33 = scmp.eq.s32.totalorder %s14, 0
    %p34 = por %p32, %p33
    %p35 = scmp.ne.s32.totalorder %s24, %s27
    %p36 = scmp.eq.s32.totalorder %s19, 1
    %p37 = por %p35, %p36
    %p38 = scmp.ne.s32.totalorder %s27, %s28
    %p39 = scmp.eq.s32.totalorder %s19, 0
    %p40 = por %p38, %p39
    %p41 = scmp.ne.s32.totalorder %s27, %s28
    %p42 = scmp.eq.s32.totalorder %s20, 1
    %p43 = por %p41, %p42
    %p45 = scmp.ne.s32.totalorder %s28, %s44
    %p46 = scmp.eq.s32.totalorder %s20, 0
    %p47 = por %p45, %p46
    %s49 = sadd.s32 %s48, 1
    %p52 = scmp.eq.s32.totalorder %s14, 1
    %p53 = scmp.ne.s32.totalorder %s48, %s50
    %p54 = scmp.eq.s32.totalorder %s14, 0
    %p55 = por %p53, %p54
    %p56 = scmp.ne.s32.totalorder %s48, %s50
    %p57 = scmp.eq.s32.totalorder %s19, 1
    %p58 = por %p56, %p57
    %p59 = scmp.ne.s32.totalorder %s50, %s51
    %p60 = scmp.eq.s32.totalorder %s19, 0
    %p61 = por %p59, %p60
    %p62 = scmp.ne.s32.totalorder %s50, %s51
    %p63 = scmp.eq.s32.totalorder %s20, 1
    %p64 = por %p62, %p63
    %p66 = scmp.ne.s32.totalorder %s51, %s65
    %p67 = scmp.eq.s32.totalorder %s20, 0
    %p68 = por %p66, %p67
    %s70 = sadd.s32 %s69, 1
    %p73 = scmp.eq.s32.totalorder %s14, 1
    %p74 = scmp.ne.s32.totalorder %s69, %s71
    %p75 = scmp.eq.s32.totalorder %s14, 0
    %p76 = por %p74, %p75
    %p77 = scmp.ne.s32.totalorder %s69, %s71
    %p78 = scmp.eq.s32.totalorder %s19, 1
    %p79 = por %p77, %p78
    %p80 = scmp.ne.s32.totalorder %s71, %s72
    %p81 = scmp.eq.s32.totalorder %s19, 0
    %p82 = por %p80, %p81
    %p83 = scmp.ne.s32.totalorder %s71, %s72
    %p84 = scmp.eq.s32.totalorder %s20, 1
    %p85 = por %p83, %p84
    %p87 = scmp.ne.s32.totalorder %s72, %s86
    %p88 = scmp.eq.s32.totalorder %s20, 0
    %p89 = por %p87, %p88
    %s91 = sadd.s32 %s90, 1
    %p94 = scmp.eq.s32.totalorder %s14, 1
    %p95 = scmp.ne.s32.totalorder %s90, %s92
    %p96 = scmp.eq.s32.totalorder %s14, 0
    %p97 = por %p95, %p96
    %p98 = scmp.ne.s32.totalorder %s90, %s92
    %p99 = scmp.eq.s32.totalorder %s19, 1
    %p100 = por %p98, %p99
    %p101 = scmp.ne.s32.totalorder %s92, %s93
    %p102 = scmp.eq.s32.totalorder %s19, 0
    %p103 = por %p101, %p102
    %p104 = scmp.ne.s32.totalorder %s92, %s93
    %p105 = scmp.eq.s32.totalorder %s20, 1
    %p106 = por %p104, %p105
    %p108 = scmp.ne.s32.totalorder %s93, %s107
    %p109 = scmp.eq.s32.totalorder %s20, 0
    %p110 = por %p108, %p109
    %s112 = sadd.s32 %s111, 1
    %p115 = scmp.eq.s32.totalorder %s14, 1
    %p116 = scmp.ne.s32.totalorder %s111, %s113
    %p117 = scmp.eq.s32.totalorder %s14, 0
    %p118 = por %p116, %p117
    %p119 = scmp.ne.s32.totalorder %s111, %s113
    %p120 = scmp.eq.s32.totalorder %s19, 1
    %p121 = por %p119, %p120
    %p122 = scmp.ne.s32.totalorder %s113, %s114
    %p123 = scmp.eq.s32.totalorder %s19, 0
    %p124 = por %p122, %p123
    %p125 = scmp.ne.s32.totalorder %s113, %s114
    %p126 = scmp.eq.s32.totalorder %s20, 1
    %p127 = por %p125, %p126
    %p129 = scmp.ne.s32.totalorder %s114, %s128
    %p130 = scmp.eq.s32.totalorder %s20, 0
    %p131 = por %p129, %p130
    %s133 = sadd.s32 %s132, 1
    %p136 = scmp.eq.s32.totalorder %s14, 1
    %p137 = scmp.ne.s32.totalorder %s132, %s134
    %p138 = scmp.eq.s32.totalorder %s14, 0
    %p139 = por %p137, %p138
    %p140 = scmp.ne.s32.totalorder %s132, %s134
    %p141 = scmp.eq.s32.totalorder %s19, 1
    %p142 = por %p140, %p141
    %p143 = scmp.ne.s32.totalorder %s134, %s135
    %p144 = scmp.eq.s32.totalorder %s19, 0
    %p145 = por %p143, %p144
    %p146 = scmp.ne.s32.totalorder %s134, %s135
    %p147 = scmp.eq.s32.totalorder %s20, 1
    %p148 = por %p146, %p147
    %p150 = scmp.ne.s32.totalorder %s135, %s149
    %p151 = scmp.eq.s32.totalorder %s20, 0
    %p152 = por %p150, %p151
    %s154 = sadd.s32 %s153, 1
    %p157 = scmp.eq.s32.totalorder %s14, 1
    %p158 = scmp.ne.s32.totalorder %s153, %s155
    %p159 = scmp.eq.s32.totalorder %s14, 0
    %p160 = por %p158, %p159
    %p161 = scmp.ne.s32.totalorder %s153, %s155
    %p162 = scmp.eq.s32.totalorder %s19, 1
    %p163 = por %p161, %p162
    %p164 = scmp.ne.s32.totalorder %s155, %s156
    %p165 = scmp.eq.s32.totalorder %s19, 0
    %p166 = por %p164, %p165
    %p167 = scmp.ne.s32.totalorder %s155, %s156
    %p168 = scmp.eq.s32.totalorder %s20, 1
    %p169 = por %p167, %p168
    %p171 = scmp.ne.s32.totalorder %s156, %s170
    %p172 = scmp.eq.s32.totalorder %s20, 0
    %p173 = por %p171, %p172
    %s175 = sadd.s32 %s174, 1
    %p178 = scmp.eq.s32.totalorder %s14, 1
    %p179 = scmp.ne.s32.totalorder %s174, %s176
    %p180 = scmp.eq.s32.totalorder %s14, 0
    %p181 = por %p179, %p180
    %p182 = scmp.ne.s32.totalorder %s174, %s176
    %p183 = scmp.eq.s32.totalorder %s19, 1
    %p184 = por %p182, %p183
    %p185 = scmp.ne.s32.totalorder %s176, %s177
    %p186 = scmp.eq.s32.totalorder %s19, 0
    %p187 = por %p185, %p186
    %p188 = scmp.ne.s32.totalorder %s176, %s177
    %p189 = scmp.eq.s32.totalorder %s20, 1
    %p190 = por %p188, %p189
    %p192 = scmp.ne.s32.totalorder %s177, %s191
    %p193 = scmp.eq.s32.totalorder %s20, 0
    %p194 = por %p192, %p193
    %s195 = ssub.s32 %s14, %s21
    %p196 = scmp.eq.s32.totalorder %s195, 0
    %s198 = sadd.s32 %s197, 1
    %s199 = scalar_select %p196, %s197, %s198
    %p202 = pneg %p196
    %p203 = scmp.eq.s32.totalorder %s14, 1
    %p204 = por %p202, %p203
    %p205 = scmp.ne.s32.totalorder %s197, %s200
    %p206 = scmp.eq.s32.totalorder %s14, 0
    %p207 = por %p205, %p206
    %p208 = scmp.ne.s32.totalorder %s197, %s200
    %p209 = scmp.eq.s32.totalorder %s19, 1
    %p210 = por %p208, %p209
    %p211 = scmp.ne.s32.totalorder %s200, %s201
    %p212 = scmp.eq.s32.totalorder %s19, 0
    %p213 = por %p211, %p212
    %p214 = scmp.ne.s32.totalorder %s200, %s201
    %p215 = scmp.eq.s32.totalorder %s20, 1
    %p216 = por %p214, %p215
    %p218 = scmp.ne.s32.totalorder %s201, %s217
    %p219 = scmp.eq.s32.totalorder %s20, 0
    %p220 = por %p218, %p219
    %p221 = scmp.le.s32.totalorder 1, %s14
    %p222 = scmp.lt.s32.totalorder %s14, 3
    %p223 = pnand %p221, %p222
    %p224 = pneg %p223
    // Predicated region
    $region9: #{cnn_lstm_forward.1} parent=5 // pred_check
      _
    $region10: #{cnn_lstm_forward.1} parent=5 // pred_check_branch
      %226 = sbr.rel (%p223) target = $region12
    $region11: #{cnn_lstm_forward.1} parent=5 // pred_region
      %s227 = ssub.s32 %s14, 1
      // Predicated region
      $region13: #{cnn_lstm_forward.1} parent=11 // pred_check
        %p228 = pneg %p61
      $region14: #{cnn_lstm_forward.1} parent=11 // pred_check_branch
        %230 = sbr.rel (%p228) target = $region16
      $region15: #{cnn_lstm_forward.1} parent=11 // pred_region
        _
      $region16: #{cnn_lstm_forward.1} parent=11 // pred_fallthru
        _
      // Predicated region
      $region17: #{cnn_lstm_forward.1} parent=11 // pred_check
        %p231 = pneg %p82
      $region18: #{cnn_lstm_forward.1} parent=11 // pred_check_branch
        %233 = sbr.rel (%p231) target = $region20
      $region19: #{cnn_lstm_forward.1} parent=11 // pred_region
        _
      $region20: #{cnn_lstm_forward.1} parent=11 // pred_fallthru
        _
      // Predicated region
      $region21: #{cnn_lstm_forward.1} parent=11 // pred_check
        %p234 = pneg %p103
      $region22: #{cnn_lstm_forward.1} parent=11 // pred_check_branch
        %236 = sbr.rel (%p234) target = $region24
      $region23: #{cnn_lstm_forward.1} parent=11 // pred_region
        _
      $region24: #{cnn_lstm_forward.1} parent=11 // pred_fallthru
        _
      // Predicated region
      $region25: #{cnn_lstm_forward.1} parent=11 // pred_check
        %p237 = pneg %p124
      $region26: #{cnn_lstm_forward.1} parent=11 // pred_check_branch
        %239 = sbr.rel (%p237) target = $region28
      $region27: #{cnn_lstm_forward.1} parent=11 // pred_region
        _
      $region28: #{cnn_lstm_forward.1} parent=11 // pred_fallthru
        _
      // Predicated region
      $region29: #{cnn_lstm_forward.1} parent=11 // pred_check
        %p240 = pneg %p145
      $region30: #{cnn_lstm_forward.1} parent=11 // pred_check_branch
        %242 = sbr.rel (%p240) target = $region32
      $region31: #{cnn_lstm_forward.1} parent=11 // pred_region
        _
      $region32: #{cnn_lstm_forward.1} parent=11 // pred_fallthru
        _
      // Predicated region
      $region33: #{cnn_lstm_forward.1} parent=11 // pred_check
        %p243 = pneg %p166
      $region34: #{cnn_lstm_forward.1} parent=11 // pred_check_branch
        %245 = sbr.rel (%p243) target = $region36
      $region35: #{cnn_lstm_forward.1} parent=11 // pred_region
        _
      $region36: #{cnn_lstm_forward.1} parent=11 // pred_fallthru
        _
      // Predicated region
      $region37: #{cnn_lstm_forward.1} parent=11 // pred_check
        %p246 = pneg %p187
      $region38: #{cnn_lstm_forward.1} parent=11 // pred_check_branch
        %248 = sbr.rel (%p246) target = $region40
      $region39: #{cnn_lstm_forward.1} parent=11 // pred_region
        _
      $region40: #{cnn_lstm_forward.1} parent=11 // pred_fallthru
        _
    $region12: #{cnn_lstm_forward.1} parent=5 // pred_fallthru
      _
    %p249 = scmp.lt.s32.totalorder %s14, 2
    // Predicated region
    $region41: #{cnn_lstm_forward.1} parent=5 // pred_check
      %p250 = pneg %p249
    $region42: #{cnn_lstm_forward.1} parent=5 // pred_check_branch
      %252 = sbr.rel (%p250) target = $region44
    $region43: #{cnn_lstm_forward.1} parent=5 // pred_region
      // Predicated region
      $region45: #{cnn_lstm_forward.1} parent=43 // pred_check
        %p253 = pneg %p34
      $region46: #{cnn_lstm_forward.1} parent=43 // pred_check_branch
        %255 = sbr.rel (%p253) target = $region48
      $region47: #{cnn_lstm_forward.1} parent=43 // pred_region
        %s256 = smul.u32 8, %s14
        %p257 = scmp.lt.s32.totalorder %s256, 15
        %s258 = scalar_select %p257, %s256, 15
        %s259 = smul.addr %s258, 4
        %s260 = scalar_lea.vmem %s0, %s259
        %s261 = smul.u32 8, %s14
      $region48: #{cnn_lstm_forward.1} parent=43 // pred_fallthru
        _
    $region44: #{cnn_lstm_forward.1} parent=5 // pred_fallthru
      _
    %p262 = scmp.le.s32.totalorder 1, %s14
    %p263 = scmp.lt.s32.totalorder %s14, 3
    %p264 = pnand %p262, %p263
    %p265 = pneg %p264
    // Predicated region
    $region49: #{cnn_lstm_forward.1} parent=5 // pred_check
      _
    $region50: #{cnn_lstm_forward.1} parent=5 // pred_check_branch
      %267 = sbr.rel (%p264) target = $region52
    $region51: #{cnn_lstm_forward.1} parent=5 // pred_region
      %s268 = ssub.s32 %s14, 1
      %s269 = smul.u32 8, %s19
      %p270 = scmp.lt.s32.totalorder %s269, 15
      %s271 = scalar_select %p270, %s269, 15
      %s272 = smul.addr %s271, 4
      %s273 = scalar_lea.vmem %s0, %s272
      %p274 = pneg %p40
      %p275 = pneg %p37
      %p276 = pneg %p61
      %p277 = pneg %p58
      %p278 = pneg %p82
      %p279 = pneg %p79
      %p280 = pneg %p103
      %p281 = pneg %p100
      %p282 = pneg %p124
      %p283 = pneg %p121
      %p284 = pneg %p145
      %p285 = pneg %p142
      %p286 = pneg %p166
      %p287 = pneg %p163
      %p288 = pneg %p187
      %p289 = pneg %p184
      %p290 = pneg %p213
      %p291 = pneg %p210
      %p292 = scmp.lt.s32.totalorder %s19, 1
      %s293 = scalar_select %p292, %s19, 1
      %s294 = smul.addr %s293, 8
      %s295 = scalar_lea.vmem %s8, %s294
      %s296 = smul.u32 8, %s19
      %p297 = scmp.lt.s32.totalorder %s296, 15
      %s298 = scalar_select %p297, %s296, 15
      %s299 = smul.addr %s298, 4
      %s300 = scalar_lea.vmem %s0, %s299
      %s301 = smul.u32 8, %s19
      %p302 = scmp.lt.s32.totalorder %s19, 1
      %s303 = scalar_select %p302, %s19, 1
      %s304 = smul.addr %s303, 8
      %s305 = scalar_lea.vmem %s8, %s304
      %v307 = vld [vmem:[%s300] sm:$0xf]
      %v308 = vld [vmem:[%s300 + $0x4] sm:$0xf]
      %v309 = vld [vmem:[%s300 + $0x8] sm:$0xf]
      %v310 = vld [vmem:[%s300 + $0xc] sm:$0xf]
      %v311 = vld [vmem:[%s300 + $0x10] sm:$0xf]
      %v312 = vld [vmem:[%s300 + $0x14] sm:$0xf]
      %v313 = vld [vmem:[%s300 + $0x18] sm:$0xf]
      %v314 = vld [vmem:[%s300 + $0x1c] sm:$0xf]
      %v315 = vld [vmem:[%s1] sm:$0xf]
      %v316 = vld [vmem:[%s1 + $0x4] sm:$0xf]
      %v325 = vunpack.c.l.b16 %v307
      %v326 = vunpack.c.l.b16 %v308
      %v327 = vunpack.c.l.b16 %v309
      %v328 = vunpack.c.l.b16 %v310
      %v329 = vunpack.c.l.b16 %v311
      %v330 = vunpack.c.l.b16 %v312
      %v331 = vunpack.c.l.b16 %v313
      %v332 = vunpack.c.l.b16 %v314
      %v333 = vpack.c.b16 %v326, %v325
      %v334 = vpack.c.b16 %v328, %v327
      %v335 = vpack.c.b16 %v330, %v329
      %v336 = vpack.c.b16 %v332, %v331
      %v339 = vunpack.c.l.b16 %v315
      %v340 = vunpack.c.l.b16 %v316
      %v341 = vpack.c.b16 %v340, %v339
      %vm343 = vcmask 130048
      %v345 = vsel %vm343, %v333, 0
      %v348 = vsel %vm343, %v334, 0
      %v351 = vsel %vm343, %v335, 0
      %v354 = vsel %vm343, %v336, 0
      %356 = vmatprep.subr.bf16.mxu0 0
      %357 = vmatpush1.bf16.msra.mxu0 0
      %358 = vmatprep.subr.bf16.mxu0 0
      %359 = vmatpush1.bf16.msra.mxu0 0
      %360 = vmatprep.subr.bf16.mxu0 0
      %361 = vmatpush1.bf16.msra.mxu0 0
      %362 = vmatprep.subr.bf16.mxu0 0
      %363 = vmatpush1.bf16.msra.mxu0 0
      %364 = vmatprep.subr.bf16.mxu0 0
      %365 = vmatpush1.bf16.msra.mxu0 0
      %366 = vmatprep.subr.bf16.mxu0 0
      %367 = vmatpush1.bf16.msra.mxu0 0
      %368 = vmatprep.subr.bf16.mxu0 0
      %369 = vmatpush1.bf16.msra.mxu0 0
      %370 = vmatprep.subr.bf16.mxu0 0
      %371 = vmatpush1.bf16.msra.mxu0 %v341
      %372 = vmatprep.subr.bf16.mxu0 0
      %373 = vmatpush2.bf16.msra.mxu0 0
      %374 = vmatprep.subr.bf16.mxu0 0
      %375 = vmatpush2.bf16.msra.mxu0 0
      %376 = vmatprep.subr.bf16.mxu0 0
      %377 = vmatpush2.bf16.msra.mxu0 0
      %378 = vmatprep.subr.bf16.mxu0 0
      %379 = vmatpush2.bf16.msra.mxu0 0
      %380 = vmatprep.subr.bf16.mxu0 0
      %381 = vmatpush2.bf16.msra.mxu0 0
      %382 = vmatprep.subr.bf16.mxu0 0
      %383 = vmatpush2.bf16.msra.mxu0 0
      %384 = vmatprep.subr.bf16.mxu0 0
      %385 = vmatpush2.bf16.msra.mxu0 0
      %386 = vmatprep.subr.bf16.mxu0 0
      %387 = vmatpush2.bf16.msra.mxu0 0
      %388 = vmatprep.mubr.bf16.mxu0 0
      %389 = vmatmul.mubr.bf16.gmra.mxu0 %v345
      %v390 = vpop.f32.mrf.mxu0
      %v391 = vadd.f32 0.0, %v390
      %v392 = vpop.f32.mrf.mxu0
      %v393 = vpop.f32.mrf.mxu0
      %v394 = vadd.f32 0.0, %v393
      %v395 = vpop.f32.mrf.mxu0
      %396 = vmatprep.mubr.bf16.mxu0 0
      %397 = vmatmul.mubr.bf16.gmra.mxu0 %v348
      %v398 = vpop.f32.mrf.mxu0
      %v399 = vadd.f32 0.0, %v398
      %v400 = vpop.f32.mrf.mxu0
      %v401 = vpop.f32.mrf.mxu0
      %v402 = vadd.f32 0.0, %v401
      %v403 = vpop.f32.mrf.mxu0
      %404 = vmatprep.mubr.bf16.mxu0 0
      %405 = vmatmul.mubr.bf16.gmra.mxu0 %v351
      %v406 = vpop.f32.mrf.mxu0
      %v407 = vadd.f32 0.0, %v406
      %v408 = vpop.f32.mrf.mxu0
      %v409 = vpop.f32.mrf.mxu0
      %v410 = vadd.f32 0.0, %v409
      %v411 = vpop.f32.mrf.mxu0
      %412 = vmatprep.mubr.bf16.mxu0 0
      %413 = vmatmul.mubr.bf16.gmra.mxu0 %v354
      %v414 = vpop.f32.mrf.mxu0
      %v415 = vadd.f32 0.0, %v414
      %v416 = vpop.f32.mrf.mxu0
      %v417 = vpop.f32.mrf.mxu0
      %v418 = vadd.f32 0.0, %v417
      %v419 = vpop.f32.mrf.mxu0
      %420 = vdwg.mxu0
      %429 = vrot.lane.b32.xlu0 %v391, 104
      %v430 = vpop.permute.xlu0 %429
      %431 = vrot.lane.b32.xlu0 %v394, 104
      %v432 = vpop.permute.xlu0 %431
      %433 = vrot.lane.b32.xlu0 %v399, 104
      %v434 = vpop.permute.xlu0 %433
      %435 = vrot.lane.b32.xlu0 %v402, 104
      %v436 = vpop.permute.xlu0 %435
      %437 = vrot.lane.b32.xlu0 %v407, 104
      %v438 = vpop.permute.xlu0 %437
      %439 = vrot.lane.b32.xlu0 %v410, 104
      %v440 = vpop.permute.xlu0 %439
      %441 = vrot.lane.b32.xlu0 %v415, 104
      %v442 = vpop.permute.xlu0 %441
      %443 = vrot.lane.b32.xlu0 %v418, 104
      %v444 = vpop.permute.xlu0 %443
      %v453 = vrot.slane %v430, 1
      %v454 = vrot.slane %v432, 1
      %v455 = vrot.slane %v434, 1
      %v456 = vrot.slane %v436, 1
      %v457 = vrot.slane %v438, 1
      %v458 = vrot.slane %v440, 1
      %v459 = vrot.slane %v442, 1
      %v460 = vrot.slane %v444, 1
      %v461 = vlaneseq
      %v462 = vshrl.u32 %v461, 7
      %vm463 = vcmp.lt.s32.totalorder %v462, 7
      %v464 = vsel %vm463, %v459, %v460
      %v465 = vsel %vm463, %v458, %v459
      %v466 = vsel %vm463, %v457, %v458
      %v467 = vsel %vm463, %v456, %v457
      %v468 = vsel %vm463, %v455, %v456
      %v469 = vsel %vm463, %v454, %v455
      %v470 = vsel %vm463, %v453, %v454
      %v471 = vsel %vm463, %v460, %v453
      %v472 = vadd.f32 %v391, %v470
      %v473 = vadd.f32 %v394, %v469
      %v474 = vadd.f32 %v399, %v468
      %v475 = vadd.f32 %v402, %v467
      %v476 = vadd.f32 %v407, %v466
      %v477 = vadd.f32 %v410, %v465
      %v478 = vadd.f32 %v415, %v464
      %v479 = vadd.f32 %v418, %v471
      %480 = vrot.lane.b32.xlu0 %v391, 80
      %v481 = vpop.permute.xlu0 %480
      %482 = vrot.lane.b32.xlu0 %v394, 80
      %v483 = vpop.permute.xlu0 %482
      %484 = vrot.lane.b32.xlu0 %v399, 80
      %v485 = vpop.permute.xlu0 %484
      %486 = vrot.lane.b32.xlu0 %v402, 80
      %v487 = vpop.permute.xlu0 %486
      %488 = vrot.lane.b32.xlu0 %v407, 80
      %v489 = vpop.permute.xlu0 %488
      %490 = vrot.lane.b32.xlu0 %v410, 80
      %v491 = vpop.permute.xlu0 %490
      %492 = vrot.lane.b32.xlu0 %v415, 80
      %v493 = vpop.permute.xlu0 %492
      %494 = vrot.lane.b32.xlu0 %v418, 80
      %v495 = vpop.permute.xlu0 %494
      %v504 = vrot.slane %v481, 2
      %v505 = vrot.slane %v483, 2
      %v506 = vrot.slane %v485, 2
      %v507 = vrot.slane %v487, 2
      %v508 = vrot.slane %v489, 2
      %v509 = vrot.slane %v491, 2
      %v510 = vrot.slane %v493, 2
      %v511 = vrot.slane %v495, 2
      %vm512 = vcmp.lt.s32.totalorder %v462, 6
      %v513 = vsel %vm512, %v510, %v511
      %v514 = vsel %vm512, %v509, %v510
      %v515 = vsel %vm512, %v508, %v509
      %v516 = vsel %vm512, %v507, %v508
      %v517 = vsel %vm512, %v506, %v507
      %v518 = vsel %vm512, %v505, %v506
      %v519 = vsel %vm512, %v504, %v505
      %v520 = vsel %vm512, %v511, %v504
      %v521 = vadd.f32 %v472, %v519
      %v522 = vadd.f32 %v473, %v518
      %v523 = vadd.f32 %v474, %v517
      %v524 = vadd.f32 %v475, %v516
      %v525 = vadd.f32 %v476, %v515
      %v526 = vadd.f32 %v477, %v514
      %v527 = vadd.f32 %v478, %v513
      %v528 = vadd.f32 %v479, %v520
      %529 = vrot.lane.b32.xlu0 %v391, 56
      %v530 = vpop.permute.xlu0 %529
      %531 = vrot.lane.b32.xlu0 %v394, 56
      %v532 = vpop.permute.xlu0 %531
      %533 = vrot.lane.b32.xlu0 %v399, 56
      %v534 = vpop.permute.xlu0 %533
      %535 = vrot.lane.b32.xlu0 %v402, 56
      %v536 = vpop.permute.xlu0 %535
      %537 = vrot.lane.b32.xlu0 %v407, 56
      %v538 = vpop.permute.xlu0 %537
      %539 = vrot.lane.b32.xlu0 %v410, 56
      %v540 = vpop.permute.xlu0 %539
      %541 = vrot.lane.b32.xlu0 %v415, 56
      %v542 = vpop.permute.xlu0 %541
      %543 = vrot.lane.b32.xlu0 %v418, 56
      %v544 = vpop.permute.xlu0 %543
      %v553 = vrot.slane %v530, 3
      %v554 = vrot.slane %v532, 3
      %v555 = vrot.slane %v534, 3
      %v556 = vrot.slane %v536, 3
      %v557 = vrot.slane %v538, 3
      %v558 = vrot.slane %v540, 3
      %v559 = vrot.slane %v542, 3
      %v560 = vrot.slane %v544, 3
      %vm561 = vcmp.lt.s32.totalorder %v462, 5
      %v562 = vsel %vm561, %v559, %v560
      %v563 = vsel %vm561, %v558, %v559
      %v564 = vsel %vm561, %v557, %v558
      %v565 = vsel %vm561, %v556, %v557
      %v566 = vsel %vm561, %v555, %v556
      %v567 = vsel %vm561, %v554, %v555
      %v568 = vsel %vm561, %v553, %v554
      %v569 = vsel %vm561, %v560, %v553
      %v570 = vadd.f32 %v521, %v568
      %v571 = vadd.f32 %v522, %v567
      %v572 = vadd.f32 %v523, %v566
      %v573 = vadd.f32 %v524, %v565
      %v574 = vadd.f32 %v525, %v564
      %v575 = vadd.f32 %v526, %v563
      %v576 = vadd.f32 %v527, %v562
      %v577 = vadd.f32 %v528, %v569
      %v578 = vld [vmem:[%s2] sm:$0x1]
      %v580 = vlaneseq
      %v581 = vshrl.u32 %v580, 7
      %v582 = vsub.s32 0, %v581
      %v583 = vrot.slane %v578, %v582
      %v585 = vadd.f32 %v570, %v583
      %v586 = vadd.f32 %v571, %v583
      %v587 = vadd.f32 %v572, %v583
      %v588 = vadd.f32 %v573, %v583
      %v589 = vadd.f32 %v574, %v583
      %v590 = vadd.f32 %v575, %v583
      %v591 = vadd.f32 %v576, %v583
      %v592 = vadd.f32 %v577, %v583
      %v593 = vmax.f32 %v585, 0.0
      %v594 = vmax.f32 %v586, 0.0
      %v595 = vmax.f32 %v587, 0.0
      %v596 = vmax.f32 %v588, 0.0
      %v597 = vmax.f32 %v589, 0.0
      %v598 = vmax.f32 %v590, 0.0
      %v599 = vmax.f32 %v591, 0.0
      %v600 = vmax.f32 %v592, 0.0
      %v601 = vld [vmem:[%s3] sm:$0xff]
      %v602 = vmul.f32 %v593, %v601
      %v603 = vmul.f32 %v594, %v601
      %v604 = vmul.f32 %v595, %v601
      %v605 = vmul.f32 %v596, %v601
      %v606 = vmul.f32 %v597, %v601
      %v607 = vmul.f32 %v598, %v601
      %v608 = vmul.f32 %v599, %v601
      %v609 = vmul.f32 %v600, %v601
      %vm610 = vcmask 195584
      %v611 = vsel %vm610, %v602, -inf
      %v612 = vrot.slane %v611, 4
      %v613 = vmax.f32 %v611, %v612
      %v614 = vrot.slane %v613, 2
      %v615 = vmax.f32 %v613, %v614
      %v616 = vrot.slane %v615, 1
      %v617 = vmax.f32 %v615, %v616
      %v618 = vsel %vm610, %v603, -inf
      %v619 = vrot.slane %v618, 4
      %v620 = vmax.f32 %v618, %v619
      %v621 = vrot.slane %v620, 2
      %v622 = vmax.f32 %v620, %v621
      %v623 = vrot.slane %v622, 1
      %v624 = vmax.f32 %v622, %v623
      %v625 = vsel %vm610, %v604, -inf
      %v626 = vrot.slane %v625, 4
      %v627 = vmax.f32 %v625, %v626
      %v628 = vrot.slane %v627, 2
      %v629 = vmax.f32 %v627, %v628
      %v630 = vrot.slane %v629, 1
      %v631 = vmax.f32 %v629, %v630
      %v632 = vsel %vm610, %v605, -inf
      %v633 = vrot.slane %v632, 4
      %v634 = vmax.f32 %v632, %v633
      %v635 = vrot.slane %v634, 2
      %v636 = vmax.f32 %v634, %v635
      %v637 = vrot.slane %v636, 1
      %v638 = vmax.f32 %v636, %v637
      %v639 = vsel %vm610, %v606, -inf
      %v640 = vrot.slane %v639, 4
      %v641 = vmax.f32 %v639, %v640
      %v642 = vrot.slane %v641, 2
      %v643 = vmax.f32 %v641, %v642
      %v644 = vrot.slane %v643, 1
      %v645 = vmax.f32 %v643, %v644
      %v646 = vsel %vm610, %v607, -inf
      %v647 = vrot.slane %v646, 4
      %v648 = vmax.f32 %v646, %v647
      %v649 = vrot.slane %v648, 2
      %v650 = vmax.f32 %v648, %v649
      %v651 = vrot.slane %v650, 1
      %v652 = vmax.f32 %v650, %v651
      %v653 = vsel %vm610, %v608, -inf
      %v654 = vrot.slane %v653, 4
      %v655 = vmax.f32 %v653, %v654
      %v656 = vrot.slane %v655, 2
      %v657 = vmax.f32 %v655, %v656
      %v658 = vrot.slane %v657, 1
      %v659 = vmax.f32 %v657, %v658
      %v660 = vsel %vm610, %v609, -inf
      %v661 = vrot.slane %v660, 4
      %v662 = vmax.f32 %v660, %v661
      %v663 = vrot.slane %v662, 2
      %v664 = vmax.f32 %v662, %v663
      %v665 = vrot.slane %v664, 1
      %v666 = vmax.f32 %v664, %v665
      %v667 = vpack.c.bf16 %v617, %v617
      %v668 = vpack.c.bf16 %v624, %v624
      %v669 = vpack.c.bf16 %v631, %v631
      %v670 = vpack.c.bf16 %v638, %v638
      %v671 = vpack.c.bf16 %v645, %v645
      %v672 = vpack.c.bf16 %v652, %v652
      %v673 = vpack.c.bf16 %v659, %v659
      %v674 = vpack.c.bf16 %v666, %v666
      %v675 = vld [vmem:[%s4] sm:$0xf]
      %v676 = vld [vmem:[%s4 + $0x4] sm:$0xf]
      %v677 = vld [vmem:[%s4 + $0x8] sm:$0xf]
      %v678 = vld [vmem:[%s5] sm:$0x1]
      %v680 = vlaneseq
      %v681 = vshrl.u32 %v680, 7
      %v682 = vsub.s32 0, %v681
      %v683 = vrot.slane %v678, %v682
      %v693 = vunpack.c.l.b16 %v667
      %v694 = vunpack.c.l.b16 %v668
      %v695 = vunpack.c.l.b16 %v669
      %v696 = vunpack.c.l.b16 %v670
      %v697 = vunpack.c.l.b16 %v671
      %v698 = vunpack.c.l.b16 %v672
      %v699 = vunpack.c.l.b16 %v673
      %v700 = vunpack.c.l.b16 %v674
      %vm701 = vcmask 1041409
      %v702 = vsel %vm701, %v694, %v693
      %vm703 = vcmask 1042434
      %v704 = vsel %vm703, %v695, %v702
      %vm705 = vcmask 1043459
      %v706 = vsel %vm705, %v696, %v704
      %vm707 = vcmask 1044484
      %v708 = vsel %vm707, %v697, %v706
      %vm709 = vcmask 1045509
      %v710 = vsel %vm709, %v698, %v708
      %vm711 = vcmask 1046534
      %v712 = vsel %vm711, %v699, %v710
      %vm713 = vcmask 1047559
      %v714 = vsel %vm713, %v700, %v712
      %v715 = vpack.c.b16 %v714, %v714
      %v719 = vunpack.c.l.b16 %v675
      %v720 = vunpack.c.l.b16 %v676
      %v721 = vunpack.c.l.b16 %v677
      %v722 = vpack.c.b16 %v720, %v719
      %v723 = vpack.c.b16 %v721, %v721
      %v726 = vsel %vm610, %v715, 0
      %vm728 = vcmask 1043456
      %v730 = vsel %vm728, %v723, 0
      %732 = vmatprep.subr.bf16.mxu0 0
      %733 = vmatpush1.bf16.msra.mxu0 0
      %734 = vmatprep.subr.bf16.mxu0 0
      %735 = vmatpush1.bf16.msra.mxu0 0
      %736 = vmatprep.subr.bf16.mxu0 0
      %737 = vmatpush1.bf16.msra.mxu0 0
      %738 = vmatprep.subr.bf16.mxu0 0
      %739 = vmatpush1.bf16.msra.mxu0 0
      %740 = vmatprep.subr.bf16.mxu0 0
      %741 = vmatpush1.bf16.msra.mxu0 0
      %742 = vmatprep.subr.bf16.mxu0 0
      %743 = vmatpush1.bf16.msra.mxu0 0
      %744 = vmatprep.subr.bf16.mxu0 0
      %745 = vmatpush1.bf16.msra.mxu0 %v730
      %746 = vmatprep.subr.bf16.mxu0 0
      %747 = vmatpush1.bf16.msra.mxu0 %v722
      %748 = vmatprep.subr.bf16.mxu0 0
      %749 = vmatpush2.bf16.msra.mxu0 0
      %750 = vmatprep.subr.bf16.mxu0 0
      %751 = vmatpush2.bf16.msra.mxu0 0
      %752 = vmatprep.subr.bf16.mxu0 0
      %753 = vmatpush2.bf16.msra.mxu0 0
      %754 = vmatprep.subr.bf16.mxu0 0
      %755 = vmatpush2.bf16.msra.mxu0 0
      %756 = vmatprep.subr.bf16.mxu0 0
      %757 = vmatpush2.bf16.msra.mxu0 0
      %758 = vmatprep.subr.bf16.mxu0 0
      %759 = vmatpush2.bf16.msra.mxu0 0
      %760 = vmatprep.subr.bf16.mxu0 0
      %761 = vmatpush2.bf16.msra.mxu0 0
      %762 = vmatprep.subr.bf16.mxu0 0
      %763 = vmatpush2.bf16.msra.mxu0 0
      %764 = vmatprep.mubr.bf16.mxu0 0
      %765 = vmatmul.mubr.bf16.gmra.mxu0 %v726
      %v766 = vpop.f32.mrf.mxu0
      %v767 = vadd.f32 %v683, %v766
      %v768 = vpop.f32.mrf.mxu0
      %v769 = vpop.f32.mrf.mxu0
      %v770 = vpop.f32.mrf.mxu0
      %771 = vdwg.mxu0
      %v772 = vxor.u32 %v767, 2147483648
      %v773 = vmul.f32 %v772, 1.442695
      %v774 = vpow.pop %v773
      %v775 = vadd.f32 %v774, 1.0
      %v776 = vrcp.pop %v775
      %v777 = vmul.f32 1.0, %v776
      %v778 = vtanh.pop %v767
      %780 = vrot.lane.b32.xlu0 %v778, 64
      %v781 = vpop.permute.xlu0 %780
      %v783 = vmul.f32 %v777, %v781
      %v784 = vtanh.pop %v783
      %786 = vrot.lane.b32.xlu0 %v784, 32
      %v787 = vpop.permute.xlu0 %786
      %v789 = vmul.f32 %v777, %v787
      %v790 = vpack.c.bf16 %v789, %v789
      %v791 = vld [vmem:[%s6] sm:$0xf]
      %v792 = vld [vmem:[%s6 + $0x4] sm:$0xf]
      %v793 = vld [vmem:[%s6 + $0x8] sm:$0xf]
      %v794 = vld [vmem:[%s6 + $0xc] sm:$0xf]
      %v795 = vld [vmem:[%s7] sm:$0x1]
      %v797 = vlaneseq
      %v798 = vshrl.u32 %v797, 7
      %v799 = vsub.s32 0, %v798
      %v800 = vrot.slane %v795, %v799
      %803 = vrot.lane.b32.xlu0 %v790, 96
      %v804 = vpop.permute.xlu0 %803
      %v809 = vunpack.c.l.b16 %v791
      %v810 = vunpack.c.l.b16 %v792
      %v811 = vunpack.c.l.b16 %v793
      %v812 = vunpack.c.l.b16 %v794
      %v813 = vpack.c.b16 %v810, %v809
      %v814 = vpack.c.b16 %v812, %v811
      %vm817 = vcmask 261120
      %v819 = vsel %vm817, %v804, 0
      %821 = vmatprep.subr.bf16.mxu0 0
      %822 = vmatpush1.bf16.msra.mxu0 0
      %823 = vmatprep.subr.bf16.mxu0 0
      %824 = vmatpush1.bf16.msra.mxu0 0
      %825 = vmatprep.subr.bf16.mxu0 0
      %826 = vmatpush1.bf16.msra.mxu0 0
      %827 = vmatprep.subr.bf16.mxu0 0
      %828 = vmatpush1.bf16.msra.mxu0 0
      %829 = vmatprep.subr.bf16.mxu0 0
      %830 = vmatpush1.bf16.msra.mxu0 0
      %831 = vmatprep.subr.bf16.mxu0 0
      %832 = vmatpush1.bf16.msra.mxu0 0
      %833 = vmatprep.subr.bf16.mxu0 0
      %834 = vmatpush1.bf16.msra.mxu0 %v814
      %835 = vmatprep.subr.bf16.mxu0 0
      %836 = vmatpush1.bf16.msra.mxu0 %v813
      %837 = vmatprep.subr.bf16.mxu0 0
      %838 = vmatpush2.bf16.msra.mxu0 0
      %839 = vmatprep.subr.bf16.mxu0 0
      %840 = vmatpush2.bf16.msra.mxu0 0
      %841 = vmatprep.subr.bf16.mxu0 0
      %842 = vmatpush2.bf16.msra.mxu0 0
      %843 = vmatprep.subr.bf16.mxu0 0
      %844 = vmatpush2.bf16.msra.mxu0 0
      %845 = vmatprep.subr.bf16.mxu0 0
      %846 = vmatpush2.bf16.msra.mxu0 0
      %847 = vmatprep.subr.bf16.mxu0 0
      %848 = vmatpush2.bf16.msra.mxu0 0
      %849 = vmatprep.subr.bf16.mxu0 0
      %850 = vmatpush2.bf16.msra.mxu0 0
      %851 = vmatprep.subr.bf16.mxu0 0
      %852 = vmatpush2.bf16.msra.mxu0 0
      %853 = vmatprep.mubr.bf16.mxu0 0
      %854 = vmatmul.mubr.bf16.gmra.mxu0 %v819
      %v855 = vpop.f32.mrf.mxu0
      %v856 = vadd.f32 %v800, %v855
      %v857 = vpop.f32.mrf.mxu0
      %v858 = vpop.f32.mrf.mxu0
      %v859 = vpop.f32.mrf.mxu0
      %860 = vdwg.mxu0
      %v861 = vxor.u32 %v856, 2147483648
      %v862 = vmul.f32 %v861, 1.442695
      %v863 = vpow.pop %v862
      %v864 = vadd.f32 %v863, 1.0
      %v865 = vrcp.pop %v864
      %v866 = vmul.f32 1.0, %v865
      %vm867 = vcmask 31744
      %868 = vst.msk [vmem:[%s305] sm:$0xff] %vm867, %v866
      %p869 = scmp.lt.s32.totalorder %s19, 1
      %s870 = scalar_select %p869, %s19, 1
      %s871 = smul.addr %s870, 8
      %s872 = scalar_lea.vmem %s8, %s871
      // Predicated region
      $region53: #{cnn_lstm_forward.1} parent=51 // pred_check
        %p873 = pneg %p210
      $region54: #{cnn_lstm_forward.1} parent=51 // pred_check_branch
        %875 = sbr.rel (%p873) target = $region56
      $region55: #{cnn_lstm_forward.1} parent=51 // pred_region
        _
      $region56: #{cnn_lstm_forward.1} parent=51 // pred_fallthru
        _
    $region52: #{cnn_lstm_forward.1} parent=5 // pred_fallthru
      _
    %p876 = scmp.le.s32.totalorder 2, %s14
    // Predicated region
    $region57: #{cnn_lstm_forward.1} parent=5 // pred_check
      %p877 = pneg %p876
    $region58: #{cnn_lstm_forward.1} parent=5 // pred_check_branch
      %879 = sbr.rel (%p877) target = $region60
    $region59: #{cnn_lstm_forward.1} parent=5 // pred_region
      %s880 = ssub.s32 %s14, 2
      // Predicated region
      $region61: #{cnn_lstm_forward.1} parent=59 // pred_check
        %p881 = pneg %p216
      $region62: #{cnn_lstm_forward.1} parent=59 // pred_check_branch
        %883 = sbr.rel (%p881) target = $region64
      $region63: #{cnn_lstm_forward.1} parent=59 // pred_region
        %p884 = scmp.lt.s32.totalorder %s20, 1
        %s885 = scalar_select %p884, %s20, 1
        %s886 = smul.addr %s885, 8
        %s887 = scalar_lea.vmem %s8, %s886
      $region64: #{cnn_lstm_forward.1} parent=59 // pred_fallthru
        _
    $region60: #{cnn_lstm_forward.1} parent=5 // pred_fallthru
      _
  $region6: #{cnn_lstm_forward.1} parent=0 // loop_footer
    %s18 = sadd.s32 1, %s14
  $region7: #{cnn_lstm_forward.1} parent=0 // loop_footer_branch
    %13 = sbr.rel target = $region3
  $region8: #{cnn_lstm_forward.1} parent=0 // loop_exit
    _

</llo_original>
